<compile_context>
chip_gen: v7x
topology: tpu7x:2x2x1
jax: 0.10.0
libtpu: 0.0.40
codegen_flags: <defaults>
</compile_context>

<pallas_src>
import functools

import jax
import jax.numpy as jnp
import numpy as np
from jax.experimental import pallas as pl
from jax.experimental.pallas import tpu as pltpu


# ----------------------------------------------------------------------------
# Kernel
# ----------------------------------------------------------------------------
def critic_kernel(state_ref, action_ref,
                  w1_ref, b1_ref,
                  w2h_ref, w2a_ref, b2_ref,
                  w3_row_ref, b3_ref,
                  out_ref):
    # layer1 + ReLU  (MXU matmul, f32 accumulate)
    h1 = jnp.dot(state_ref[...], w1_ref[...],
                 preferred_element_type=jnp.float32) + b1_ref[...]
    h1 = jnp.maximum(h1, 0.0)

    # layer2 on concat([h1, action]) expressed as split matmul + rank-1 update
    h2 = (jnp.dot(h1, w2h_ref[...], preferred_element_type=jnp.float32)
          + action_ref[...] * w2a_ref[...]      # (TB,1)*(1,H) -> (TB,H)
          + b2_ref[...])
    h2 = jnp.maximum(h2, 0.0)

    # layer3: N=1 output -> VPU multiply + lane reduce instead of an MXU matmul
    out_ref[...] = (jnp.sum(h2 * w3_row_ref[...], axis=-1, keepdims=True)
                    + b3_ref[0, 0])


# ----------------------------------------------------------------------------
# Wrapper
# ----------------------------------------------------------------------------
def critic_forward(observations, action, params, *, tile_batch=1024):
    state = jnp.squeeze(observations['Mstate'], axis=-2)      # (B, S)
    B, S = state.shape
    H = params['w1'].shape[1]

    w1, b1 = params['w1'], params['b1']
    w2h, w2a, b2 = params['w2h'], params['w2a'], params['b2']
    w3_row = params['w3_row']                                  # (1, H)
    b3 = params['b3'].reshape(1, 1)                            # scalar in SMEM

    # Batch tiling: single full-array block for small B, padded tiles otherwise.
    if B <= tile_batch:
        TB, Bp = B, B
    else:
        TB = tile_batch
        Bp = pl.cdiv(B, TB) * TB
        pad = Bp - B
        state = jnp.pad(state, ((0, pad), (0, 0)))
        action = jnp.pad(action, ((0, pad), (0, 0)))
    grid = (Bp // TB,)

    def batch_tile(feat):
        return pl.BlockSpec((TB, feat), lambda i: (i, 0))

    def resident(arr):
        # Whole-array block, same block index every step -> DMA'd once,
        # stays VMEM-resident across all grid iterations.
        return pl.BlockSpec(arr.shape, lambda i: (0,) * arr.ndim)

    in_specs = [
        batch_tile(S),                                   # state
        batch_tile(1),                                   # action
        resident(w1), resident(b1),
        resident(w2h), resident(w2a), resident(b2),
        resident(w3_row),
        pl.BlockSpec(memory_space=pltpu.MemorySpace.SMEM),   # b3 scalar
    ]
    out_spec = batch_tile(1)

    flops = 2 * Bp * (S * H + H * H + 2 * H)
    bytes_accessed = 4 * (Bp * (S + 1 + 1)
                          + S * H + H + (H + 1) * H + H + H + 1)

    out = pl.pallas_call(
        critic_kernel,
        out_shape=jax.ShapeDtypeStruct((Bp, 1), jnp.float32),
        grid=grid,
        in_specs=in_specs,
        out_specs=out_spec,
        compiler_params=pltpu.CompilerParams(
            dimension_semantics=("parallel",)),
        cost_estimate=pl.CostEstimate(flops=flops,
                                      transcendentals=0,
                                      bytes_accessed=bytes_accessed),
    )(state, action, w1, b1, w2h, w2a, b2, w3_row, b3)

    return out[:B] if Bp != B else out


# ----------------------------------------------------------------------------
# Params / reference
# ----------------------------------------------------------------------------
def init_params(key, state_dim, hidden_dim):
    """Deterministic init matching nn.Linear's U(-1/sqrt(fan_in), 1/sqrt(fan_in)).

    Weights stored as (in_features, out_features).  W2 is pre-split into the
    hidden part (w2h) and the action row (w2a) once, outside the hot path,
    and W3 is pre-transposed to a (1, H) row for the in-kernel lane reduction.
    """
    def linear(k, fan_in, fan_out):
        kw, kb = jax.random.split(k)
        bound = 1.0 / np.sqrt(fan_in)
        w = jax.random.uniform(kw, (fan_in, fan_out), jnp.float32, -bound, bound)
        b = jax.random.uniform(kb, (1, fan_out), jnp.float32, -bound, bound)
        return w, b

    k1, k2, k3 = jax.random.split(key, 3)
    w1, b1 = linear(k1, state_dim, hidden_dim)
    w2, b2 = linear(k2, hidden_dim + 1, hidden_dim)
    w3, b3 = linear(k3, hidden_dim, 1)
    return dict(
        w1=w1, b1=b1,
        w2=w2, b2=b2,
        w2h=w2[:hidden_dim, :],              # (H, H)
        w2a=w2[hidden_dim:hidden_dim + 1, :],  # (1, H)
        w3=w3, b3=b3,
        w3_row=jnp.transpose(w3),            # (1, H)
    )


def reference_forward(observations, action, params):
    state = jnp.squeeze(observations['Mstate'], axis=-2)
    h1 = jax.nn.relu(state @ params['w1'] + params['b1'])
    cat = jnp.concatenate([h1, action], axis=1)
    h2 = jax.nn.relu(cat @ params['w2'] + params['b2'])
    return h2 @ params['w3'] + params['b3']


# ----------------------------------------------------------------------------
# Test
# ----------------------------------------------------------------------------
if __name__ == "__main__":
    B, state_dim, hidden_dim = 2, 4, 32

    key = jax.random.PRNGKey(0)
    k_params, k_state, k_action = jax.random.split(key, 3)

    params = init_params(k_params, state_dim, hidden_dim)
    observations = {
        'Mstate': jax.random.normal(k_state, (B, 1, state_dim), jnp.float32)
    }
    action = jax.random.normal(k_action, (B, 1), jnp.float32)

    out = critic_forward(observations, action, params)
    out = jax.block_until_ready(out)

    ref = reference_forward(observations, action, params)
    np.testing.assert_allclose(np.asarray(out), np.asarray(ref),
                               rtol=1e-5, atol=1e-5)
    assert out.shape == (B, 1)

    # Also exercise the tiled (multi-step grid) path with a larger batch.
    B2 = 2500  # forces padding + grid of 3 with tile_batch=1024
    kb_s, kb_a = jax.random.split(jax.random.PRNGKey(1))
    obs_big = {'Mstate': jax.random.normal(kb_s, (B2, 1, state_dim), jnp.float32)}
    act_big = jax.random.normal(kb_a, (B2, 1), jnp.float32)
    out_big = jax.block_until_ready(critic_forward(obs_big, act_big, params))
    ref_big = reference_forward(obs_big, act_big, params)
    np.testing.assert_allclose(np.asarray(out_big), np.asarray(ref_big),
                               rtol=1e-4, atol=1e-5)
    assert out_big.shape == (B2, 1)

    print("KERNEL_OK")
</pallas_src>

<mosaic_0001>
module attributes {stable_mosaic.version = 11 : i64} {
  func.func @critic_kernel(%arg0: i32, %arg1: memref<2x4xf32, #tpu.memory_space<vmem>>, %arg2: memref<2x1xf32, #tpu.memory_space<vmem>>, %arg3: memref<4x32xf32, #tpu.memory_space<vmem>>, %arg4: memref<1x32xf32, #tpu.memory_space<vmem>>, %arg5: memref<32x32xf32, #tpu.memory_space<vmem>>, %arg6: memref<1x32xf32, #tpu.memory_space<vmem>>, %arg7: memref<1x32xf32, #tpu.memory_space<vmem>>, %arg8: memref<1x32xf32, #tpu.memory_space<vmem>>, %arg9: memref<1x1xf32, #tpu.memory_space<smem>>, %arg10: memref<2x1xf32, #tpu.memory_space<vmem>>) attributes {dimension_semantics = [#tpu.dimension_semantics<parallel>], iteration_bounds = array<i64: 1>, scalar_prefetch = 0 : i64, scratch_operands = 0 : i64, tpu.core_type = #tpu.core_type<tc>, window_params = [{transform_indices = @transform_0, window_bounds = array<i64: 2, 4>}, {transform_indices = @transform_1, window_bounds = array<i64: 2, 1>}, {pipeline_mode = #tpu.pipeline_mode<synchronous>, transform_indices = @transform_2, window_bounds = array<i64: 4, 32>}, {pipeline_mode = #tpu.pipeline_mode<synchronous>, transform_indices = @transform_3, window_bounds = array<i64: 1, 32>}, {pipeline_mode = #tpu.pipeline_mode<synchronous>, transform_indices = @transform_4, window_bounds = array<i64: 32, 32>}, {pipeline_mode = #tpu.pipeline_mode<synchronous>, transform_indices = @transform_5, window_bounds = array<i64: 1, 32>}, {pipeline_mode = #tpu.pipeline_mode<synchronous>, transform_indices = @transform_6, window_bounds = array<i64: 1, 32>}, {pipeline_mode = #tpu.pipeline_mode<synchronous>, transform_indices = @transform_7, window_bounds = array<i64: 1, 32>}, {transform_indices = @transform_8, window_bounds = array<i64: 1, 1>}, {transform_indices = @transform_9, window_bounds = array<i64: 2, 1>}]} {
    %c0 = arith.constant 0 : index
    %c0_0 = arith.constant 0 : index
    %0 = vector.load %arg1[%c0, %c0_0] : memref<2x4xf32, #tpu.memory_space<vmem>>, vector<2x4xf32>
    %c0_1 = arith.constant 0 : index
    %c0_2 = arith.constant 0 : index
    %1 = vector.load %arg3[%c0_1, %c0_2] : memref<4x32xf32, #tpu.memory_space<vmem>>, vector<4x32xf32>
    %cst = arith.constant dense<0.000000e+00> : vector<2x32xf32>
    %2 = tpu.matmul %0, %1, %cst {dimension_numbers = #tpu.dot_dimension_numbers<[1], [0], [0], [1], [0, 0, 1, 1], [], []>} : vector<2x4xf32>, vector<4x32xf32>, vector<2x32xf32> -> vector<2x32xf32>
    %c0_3 = arith.constant 0 : index
    %c0_4 = arith.constant 0 : index
    %3 = vector.load %arg4[%c0_3, %c0_4] : memref<1x32xf32, #tpu.memory_space<vmem>>, vector<1x32xf32>
    %4 = vector.broadcast %3 : vector<1x32xf32> to vector<2x32xf32>
    %5 = arith.addf %2, %4 : vector<2x32xf32>
    %cst_5 = arith.constant 0.000000e+00 : f32
    %6 = vector.broadcast %cst_5 : f32 to vector<2x32xf32>
    %7 = arith.maximumf %5, %6 : vector<2x32xf32>
    %c0_6 = arith.constant 0 : index
    %c0_7 = arith.constant 0 : index
    %8 = vector.load %arg5[%c0_6, %c0_7] : memref<32x32xf32, #tpu.memory_space<vmem>>, vector<32x32xf32>
    %cst_8 = arith.constant dense<0.000000e+00> : vector<2x32xf32>
    %9 = tpu.matmul %7, %8, %cst_8 {dimension_numbers = #tpu.dot_dimension_numbers<[1], [0], [0], [1], [0, 0, 1, 1], [], []>} : vector<2x32xf32>, vector<32x32xf32>, vector<2x32xf32> -> vector<2x32xf32>
    %c0_9 = arith.constant 0 : index
    %c0_10 = arith.constant 0 : index
    %10 = vector.load %arg2[%c0_9, %c0_10] : memref<2x1xf32, #tpu.memory_space<vmem>>, vector<2x1xf32>
    %c0_11 = arith.constant 0 : index
    %c0_12 = arith.constant 0 : index
    %11 = vector.load %arg6[%c0_11, %c0_12] : memref<1x32xf32, #tpu.memory_space<vmem>>, vector<1x32xf32>
    %12 = vector.broadcast %10 : vector<2x1xf32> to vector<2x32xf32>
    %13 = vector.broadcast %11 : vector<1x32xf32> to vector<2x32xf32>
    %14 = arith.mulf %12, %13 : vector<2x32xf32>
    %15 = arith.addf %9, %14 : vector<2x32xf32>
    %c0_13 = arith.constant 0 : index
    %c0_14 = arith.constant 0 : index
    %16 = vector.load %arg7[%c0_13, %c0_14] : memref<1x32xf32, #tpu.memory_space<vmem>>, vector<1x32xf32>
    %17 = vector.broadcast %16 : vector<1x32xf32> to vector<2x32xf32>
    %18 = arith.addf %15, %17 : vector<2x32xf32>
    %cst_15 = arith.constant 0.000000e+00 : f32
    %19 = vector.broadcast %cst_15 : f32 to vector<2x32xf32>
    %20 = arith.maximumf %18, %19 : vector<2x32xf32>
    %c0_16 = arith.constant 0 : index
    %c0_17 = arith.constant 0 : index
    %21 = vector.load %arg8[%c0_16, %c0_17] : memref<1x32xf32, #tpu.memory_space<vmem>>, vector<1x32xf32>
    %22 = vector.broadcast %21 : vector<1x32xf32> to vector<2x32xf32>
    %23 = arith.mulf %20, %22 : vector<2x32xf32>
    %cst_18 = arith.constant dense<0.000000e+00> : vector<2xf32>
    %24 = vector.multi_reduction <add>, %23, %cst_18 [1] : vector<2x32xf32> to vector<2xf32>
    %25 = vector.shape_cast %24 : vector<2xf32> to vector<2x1xf32>
    %c0_19 = arith.constant 0 : index
    %c0_20 = arith.constant 0 : index
    %26 = memref.load %arg9[%c0_19, %c0_20] : memref<1x1xf32, #tpu.memory_space<smem>>
    %27 = vector.broadcast %26 : f32 to vector<2x1xf32>
    %28 = arith.addf %25, %27 : vector<2x1xf32>
    %c0_21 = arith.constant 0 : index
    %c0_22 = arith.constant 0 : index
    %29 = vector.load %arg10[%c0_21, %c0_22] : memref<2x1xf32, #tpu.memory_space<vmem>>, vector<2x1xf32>
    tpu.vector_store %arg10[%c0_21, %c0_22], %28 {strides = array<i32>} : memref<2x1xf32, #tpu.memory_space<vmem>>, vector<2x1xf32>,
    return
  }
  func.func @transform_0(%arg0: i32) -> (i32, i32) {
    %c0_i32 = arith.constant 0 : i32
    %c0_i32_0 = arith.constant 0 : i32
    return %arg0, %c0_i32 : i32, i32
  }
  func.func @transform_1(%arg0: i32) -> (i32, i32) {
    %c0_i32 = arith.constant 0 : i32
    %c0_i32_0 = arith.constant 0 : i32
    return %arg0, %c0_i32 : i32, i32
  }
  func.func @transform_2(%arg0: i32) -> (i32, i32) {
    %c0_i32 = arith.constant 0 : i32
    %c0_i32_0 = arith.constant 0 : i32
    %c0_i32_1 = arith.constant 0 : i32
    return %c0_i32, %c0_i32_0 : i32, i32
  }
  func.func @transform_3(%arg0: i32) -> (i32, i32) {
    %c0_i32 = arith.constant 0 : i32
    %c0_i32_0 = arith.constant 0 : i32
    %c0_i32_1 = arith.constant 0 : i32
    return %c0_i32, %c0_i32_0 : i32, i32
  }
  func.func @transform_4(%arg0: i32) -> (i32, i32) {
    %c0_i32 = arith.constant 0 : i32
    %c0_i32_0 = arith.constant 0 : i32
    %c0_i32_1 = arith.constant 0 : i32
    return %c0_i32, %c0_i32_0 : i32, i32
  }
  func.func @transform_5(%arg0: i32) -> (i32, i32) {
    %c0_i32 = arith.constant 0 : i32
    %c0_i32_0 = arith.constant 0 : i32
    %c0_i32_1 = arith.constant 0 : i32
    return %c0_i32, %c0_i32_0 : i32, i32
  }
  func.func @transform_6(%arg0: i32) -> (i32, i32) {
    %c0_i32 = arith.constant 0 : i32
    %c0_i32_0 = arith.constant 0 : i32
    %c0_i32_1 = arith.constant 0 : i32
    return %c0_i32, %c0_i32_0 : i32, i32
  }
  func.func @transform_7(%arg0: i32) -> (i32, i32) {
    %c0_i32 = arith.constant 0 : i32
    %c0_i32_0 = arith.constant 0 : i32
    %c0_i32_1 = arith.constant 0 : i32
    return %c0_i32, %c0_i32_0 : i32, i32
  }
  func.func @transform_8(%arg0: i32) -> (i32, i32) {
    %c0_i32 = arith.constant 0 : i32
    %c0_i32_0 = arith.constant 0 : i32
    %c0_i32_1 = arith.constant 0 : i32
    return %c0_i32, %c0_i32_0 : i32, i32
  }
  func.func @transform_9(%arg0: i32) -> (i32, i32) {
    %c0_i32 = arith.constant 0 : i32
    %c0_i32_0 = arith.constant 0 : i32
    return %arg0, %c0_i32 : i32, i32
  }
}

</mosaic_0001>

<llo_original>
// kernel: tpu_custom_call.1
$region0: #{tpu_custom_call.1}
  #allocation0 [shape = 'u32[]', space=smem, size = 0x4, offset = 0x4, fixed_abs, tag = 'smem constant byte address 0x4 - core index']
  #allocation1 [shape = 'u32[144,128]{1,0:T(1,128)}', space=vmem, size = 0x12000, scoped, tag = 'internal scratch']
  #allocation2 [shape = 'f32[1,1]{1,0:T(1,128)S(6)}', space=smem, size = 0x200, scoped, tag = 'scoped memory for tpu_custom_call.1']
  %s0 = inlined_call_operand.vmem [shape: f32[2,4], index: 0, kind: input, shape index: {}]
  %s1 = inlined_call_operand.vmem [shape: f32[2,1], index: 1, kind: input, shape index: {}]
  %s2 = inlined_call_operand.vmem [shape: f32[4,32], index: 2, kind: input, shape index: {}]
  %s3 = inlined_call_operand.vmem [shape: f32[1,32], index: 3, kind: input, shape index: {}]
  %s4 = inlined_call_operand.hbm [shape: f32[32,32], index: 4, kind: input, shape index: {}]
  %s5 = inlined_call_operand.vmem [shape: f32[1,32], index: 5, kind: input, shape index: {}]
  %s6 = inlined_call_operand.vmem [shape: f32[1,32], index: 6, kind: input, shape index: {}]
  %s7 = inlined_call_operand.vmem [shape: f32[1,32], index: 7, kind: input, shape index: {}]
  %s8 = inlined_call_operand.<no memory space> [shape: f32[1,1], index: 8, kind: input, shape index: {}]
  %s9 = inlined_call_operand.vmem [shape: f32[2,1], index: 9, kind: output, shape index: {}]
  %s10 = sld [smem:[#allocation0]]
  $region50: #{tpu_custom_call.1} parent=0
    _
  %s12 = ssub.s32 1, %s10
  %s13 = scalar_select 0, %s12, %s10
  %14 = sst [smem:[#allocation2]] %s8
  $region1: #{tpu_custom_call.1} parent=0
    #allocation3 [shape = 'u8[16384]{0}', space=vmem, size = 0x4000, scoped, tag = 'input window, operand 4, single buffered']
    #allocation4 [shape = 's32[1]{0}', space=sflag, size = 0x4, scoped, tag = 'scoped memory for tpu_custom_call.1']
    %15 = vsyncpa [#allocation4], 0
    // Predicated region
    $region2: #{tpu_custom_call.1} parent=1 // pred_check
      _
    $region3: #{tpu_custom_call.1} parent=1 // pred_check_branch
      %17 = sbr.rel (0) target = $region5
    $region4: #{tpu_custom_call.1} parent=1 // pred_region
      _
    $region5: #{tpu_custom_call.1} parent=1 // pred_fallthru
      _
    // Predicated region
    $region6: #{tpu_custom_call.1} parent=1 // pred_check
      _
    $region7: #{tpu_custom_call.1} parent=1 // pred_check_branch
      %19 = sbr.rel (0) target = $region9
    $region8: #{tpu_custom_call.1} parent=1 // pred_region
      _
    $region9: #{tpu_custom_call.1} parent=1 // pred_fallthru
      _
    // Predicated region
    $region10: #{tpu_custom_call.1} parent=1 // pred_check
      _
    $region11: #{tpu_custom_call.1} parent=1 // pred_check_branch
      %21 = sbr.rel (0) target = $region13
    $region12: #{tpu_custom_call.1} parent=1 // pred_region
      _
    $region13: #{tpu_custom_call.1} parent=1 // pred_fallthru
      _
    // Predicated region
    $region14: #{tpu_custom_call.1} parent=1 // pred_check
      _
    $region15: #{tpu_custom_call.1} parent=1 // pred_check_branch
      %23 = sbr.rel (0) target = $region17
    $region16: #{tpu_custom_call.1} parent=1 // pred_region
      _
    $region17: #{tpu_custom_call.1} parent=1 // pred_fallthru
      _
    // Predicated region
    $region18: #{tpu_custom_call.1} parent=1 // pred_check
      _
    $region19: #{tpu_custom_call.1} parent=1 // pred_check_branch
      %25 = sbr.rel (0) target = $region21
    $region20: #{tpu_custom_call.1} parent=1 // pred_region
      %s27 = ssub.s32 512, 512
      %28 = vsyncadd [#allocation4], %s27
      %s29 = sshll.u32 [#allocation3], 4
      %s30 = int_to_ptr.vmem [resolvable:$true] %s29
      %35 = dma.hbm_to_vmem [thread:$0]  %s4, 512, %s30, [#allocation4], 128, 128, 8
    $region21: #{tpu_custom_call.1} parent=1 // pred_fallthru
      _
    // Predicated region
    $region22: #{tpu_custom_call.1} parent=1 // pred_check
      _
    $region23: #{tpu_custom_call.1} parent=1 // pred_check_branch
      %37 = sbr.rel (0) target = $region25
    $region24: #{tpu_custom_call.1} parent=1 // pred_region
      _
    $region25: #{tpu_custom_call.1} parent=1 // pred_fallthru
      _
    // Predicated region
    $region26: #{tpu_custom_call.1} parent=1 // pred_check
      _
    $region27: #{tpu_custom_call.1} parent=1 // pred_check_branch
      %39 = sbr.rel (0) target = $region29
    $region28: #{tpu_custom_call.1} parent=1 // pred_region
      _
    $region29: #{tpu_custom_call.1} parent=1 // pred_fallthru
      _
    // Predicated region
    $region30: #{tpu_custom_call.1} parent=1 // pred_check
      _
    $region31: #{tpu_custom_call.1} parent=1 // pred_check_branch
      %41 = sbr.rel (0) target = $region33
    $region32: #{tpu_custom_call.1} parent=1 // pred_region
      _
    $region33: #{tpu_custom_call.1} parent=1 // pred_fallthru
      _
    // Predicated region
    $region34: #{tpu_custom_call.1} parent=1 // pred_check
      _
    $region35: #{tpu_custom_call.1} parent=1 // pred_check_branch
      %43 = sbr.rel (0) target = $region37
    $region36: #{tpu_custom_call.1} parent=1 // pred_region
      _
    $region37: #{tpu_custom_call.1} parent=1 // pred_fallthru
      _
    // Predicated region
    $region38: #{tpu_custom_call.1} parent=1 // pred_check
      _
    $region39: #{tpu_custom_call.1} parent=1 // pred_check_branch
      %45 = sbr.rel (0) target = $region41
    $region40: #{tpu_custom_call.1} parent=1 // pred_region
      %46 = dma.done [#allocation4], 512
    $region41: #{tpu_custom_call.1} parent=1 // pred_fallthru
      _
    %v47 = vld [vmem:[%s0] sm:$0x3]
    %v48 = vld [vmem:[%s2] sm:$0xf]
    %v49 = vld [vmem:[%s3] sm:$0x1]
    %v51 = vlaneseq
    %v52 = vshrl.u32 %v51, 7
    %v53 = vsub.s32 0, %v52
    %v54 = vrot.slane %v49, %v53
    %vm56 = vcmask 31744
    %v58 = vsel %vm56, %v47, 0
    %vm60 = vcmask 1043456
    %v62 = vsel %vm60, %v48, 0
    %64 = vmatprep.subr.mxu0 0.0
    %65 = vmatpush1.msra.mxu0 %v62
    %66 = vmatprep.subr.mxu0 0.0
    %67 = vmatpush1.msra.mxu0 0.0
    %68 = vmatprep.subr.mxu0 0.0
    %69 = vmatpush1.msra.mxu0 0.0
    %70 = vmatprep.subr.mxu0 0.0
    %71 = vmatpush1.msra.mxu0 0.0
    %72 = vmatprep.subr.mxu0 0.0
    %73 = vmatpush1.msra.mxu0 0.0
    %74 = vmatprep.subr.mxu0 0.0
    %75 = vmatpush1.msra.mxu0 0.0
    %76 = vmatprep.subr.mxu0 0.0
    %77 = vmatpush1.msra.mxu0 0.0
    %78 = vmatprep.subr.mxu0 0.0
    %79 = vmatpush1.msra.mxu0 0.0
    %80 = vmatprep.subr.mxu0 0.0
    %81 = vmatpush1.msra.mxu0 0.0
    %82 = vmatprep.subr.mxu0 0.0
    %83 = vmatpush1.msra.mxu0 0.0
    %84 = vmatprep.subr.mxu0 0.0
    %85 = vmatpush1.msra.mxu0 0.0
    %86 = vmatprep.subr.mxu0 0.0
    %87 = vmatpush1.msra.mxu0 0.0
    %88 = vmatprep.subr.mxu0 0.0
    %89 = vmatpush1.msra.mxu0 0.0
    %90 = vmatprep.subr.mxu0 0.0
    %91 = vmatpush1.msra.mxu0 0.0
    %92 = vmatprep.subr.mxu0 0.0
    %93 = vmatpush1.msra.mxu0 0.0
    %94 = vmatprep.subr.mxu0 0.0
    %95 = vmatpush1.msra.mxu0 0.0
    %96 = vmatprep.subr.mxu0 0.0
    %97 = vmatpush1.msra.mxu0 0.0
    %98 = vmatprep.subr.mxu0 0.0
    %99 = vmatpush1.msra.mxu0 0.0
    %100 = vmatprep.subr.mxu0 0.0
    %101 = vmatpush1.msra.mxu0 0.0
    %102 = vmatprep.subr.mxu0 0.0
    %103 = vmatpush1.msra.mxu0 0.0
    %104 = vmatprep.subr.mxu0 0.0
    %105 = vmatpush1.msra.mxu0 0.0
    %106 = vmatprep.subr.mxu0 0.0
    %107 = vmatpush1.msra.mxu0 0.0
    %108 = vmatprep.subr.mxu0 0.0
    %109 = vmatpush1.msra.mxu0 0.0
    %110 = vmatprep.subr.mxu0 0.0
    %111 = vmatpush1.msra.mxu0 0.0
    %112 = vmatprep.subr.mxu0 0.0
    %113 = vmatpush1.msra.mxu0 0.0
    %114 = vmatprep.subr.mxu0 0.0
    %115 = vmatpush1.msra.mxu0 0.0
    %116 = vmatprep.subr.mxu0 0.0
    %117 = vmatpush1.msra.mxu0 0.0
    %118 = vmatprep.subr.mxu0 0.0
    %119 = vmatpush1.msra.mxu0 0.0
    %120 = vmatprep.subr.mxu0 0.0
    %121 = vmatpush1.msra.mxu0 0.0
    %122 = vmatprep.subr.mxu0 0.0
    %123 = vmatpush1.msra.mxu0 0.0
    %124 = vmatprep.subr.mxu0 0.0
    %125 = vmatpush1.msra.mxu0 0.0
    %126 = vmatprep.subr.mxu0 0.0
    %127 = vmatpush1.msra.mxu0 0.0
    %128 = vmatprep.mubr.f32.mxu0 0.0
    %129 = vmatmul.mubr.f32.gmra.mrb[0].mxu0 %v58
    %v130 = vpop.f32.mrb[0].mxu0
    %v131 = vadd.f32 %v54, %v130
    %v132 = vpop.f32.mrb[0].mxu0
    %133 = vdwg.mxu0
    %v134 = vmax.f32 %v131, 0.0
    %v135 = vld [vmem:[#allocation3] sm:$0xff]
    %v136 = vld [vmem:[#allocation3 + $0x8] sm:$0xff]
    %v137 = vld [vmem:[#allocation3 + $0x10] sm:$0xff]
    %v138 = vld [vmem:[#allocation3 + $0x18] sm:$0xff]
    %v139 = vld [vmem:[%s1] sm:$0x3]
    %v140 = vld [vmem:[%s5] sm:$0x1]
    %142 = vset.pattern.permute.xlu0 0
    %143 = vperm.xlu0 %142, %v139
    %v144 = vpop.permute.xlu0 %143
    %v147 = vlaneseq
    %v148 = vshrl.u32 %v147, 7
    %v149 = vsub.s32 0, %v148
    %v150 = vrot.slane %v140, %v149
    %v152 = vmul.f32 %v144, %v150
    %vm153 = vcmask 261120
    %v155 = vsel %vm153, %v134, 0
    %157 = vmatprep.subr.mxu0 0.0
    %158 = vmatpush1.msra.mxu0 %v135
    %159 = vmatprep.subr.mxu0 0.0
    %160 = vmatpush1.msra.mxu0 %v136
    %161 = vmatprep.subr.mxu0 0.0
    %162 = vmatpush1.msra.mxu0 %v137
    %163 = vmatprep.subr.mxu0 0.0
    %164 = vmatpush1.msra.mxu0 %v138
    %165 = vmatprep.subr.mxu0 0.0
    %166 = vmatpush1.msra.mxu0 0.0
    %167 = vmatprep.subr.mxu0 0.0
    %168 = vmatpush1.msra.mxu0 0.0
    %169 = vmatprep.subr.mxu0 0.0
    %170 = vmatpush1.msra.mxu0 0.0
    %171 = vmatprep.subr.mxu0 0.0
    %172 = vmatpush1.msra.mxu0 0.0
    %173 = vmatprep.subr.mxu0 0.0
    %174 = vmatpush1.msra.mxu0 0.0
    %175 = vmatprep.subr.mxu0 0.0
    %176 = vmatpush1.msra.mxu0 0.0
    %177 = vmatprep.subr.mxu0 0.0
    %178 = vmatpush1.msra.mxu0 0.0
    %179 = vmatprep.subr.mxu0 0.0
    %180 = vmatpush1.msra.mxu0 0.0
    %181 = vmatprep.subr.mxu0 0.0
    %182 = vmatpush1.msra.mxu0 0.0
    %183 = vmatprep.subr.mxu0 0.0
    %184 = vmatpush1.msra.mxu0 0.0
    %185 = vmatprep.subr.mxu0 0.0
    %186 = vmatpush1.msra.mxu0 0.0
    %187 = vmatprep.subr.mxu0 0.0
    %188 = vmatpush1.msra.mxu0 0.0
    %189 = vmatprep.subr.mxu0 0.0
    %190 = vmatpush1.msra.mxu0 0.0
    %191 = vmatprep.subr.mxu0 0.0
    %192 = vmatpush1.msra.mxu0 0.0
    %193 = vmatprep.subr.mxu0 0.0
    %194 = vmatpush1.msra.mxu0 0.0
    %195 = vmatprep.subr.mxu0 0.0
    %196 = vmatpush1.msra.mxu0 0.0
    %197 = vmatprep.subr.mxu0 0.0
    %198 = vmatpush1.msra.mxu0 0.0
    %199 = vmatprep.subr.mxu0 0.0
    %200 = vmatpush1.msra.mxu0 0.0
    %201 = vmatprep.subr.mxu0 0.0
    %202 = vmatpush1.msra.mxu0 0.0
    %203 = vmatprep.subr.mxu0 0.0
    %204 = vmatpush1.msra.mxu0 0.0
    %205 = vmatprep.subr.mxu0 0.0
    %206 = vmatpush1.msra.mxu0 0.0
    %207 = vmatprep.subr.mxu0 0.0
    %208 = vmatpush1.msra.mxu0 0.0
    %209 = vmatprep.subr.mxu0 0.0
    %210 = vmatpush1.msra.mxu0 0.0
    %211 = vmatprep.subr.mxu0 0.0
    %212 = vmatpush1.msra.mxu0 0.0
    %213 = vmatprep.subr.mxu0 0.0
    %214 = vmatpush1.msra.mxu0 0.0
    %215 = vmatprep.subr.mxu0 0.0
    %216 = vmatpush1.msra.mxu0 0.0
    %217 = vmatprep.subr.mxu0 0.0
    %218 = vmatpush1.msra.mxu0 0.0
    %219 = vmatprep.subr.mxu0 0.0
    %220 = vmatpush1.msra.mxu0 0.0
    %221 = vmatprep.mubr.f32.mxu0 0.0
    %222 = vmatmul.mubr.f32.gmra.mrb[0].mxu0 %v155
    %v223 = vpop.f32.mrb[0].mxu0
    %v224 = vadd.f32 %v152, %v223
    %v225 = vpop.f32.mrb[0].mxu0
    %226 = vdwg.mxu0
    %v227 = vld [vmem:[%s6] sm:$0x1]
    %v229 = vlaneseq
    %v230 = vshrl.u32 %v229, 7
    %v231 = vsub.s32 0, %v230
    %v232 = vrot.slane %v227, %v231
    %v234 = vadd.f32 %v224, %v232
    %v235 = vmax.f32 %v234, 0.0
    %v236 = vld [vmem:[%s7] sm:$0x1]
    %v238 = vlaneseq
    %v239 = vshrl.u32 %v238, 7
    %v240 = vsub.s32 0, %v239
    %v241 = vrot.slane %v236, %v240
    %v243 = vmul.f32 %v235, %v241
    %vm244 = vcmask 254976
    %v245 = vsel %vm244, %v243, 0.0
    %246 = vadd.xlane.f32.xlu0 %v245
    %v247 = vpop.xlane.xlu0 %246
    %s248 = sld [smem:[#allocation2]]
    %v249 = vstv %s248
    %v250 = vadd.f32 %v247, %v249
    %vm251 = vcmask 1024
    %252 = vst.msk [vmem:[%s9] sm:$0x3] %vm251, %v250
    // Predicated region
    $region42: #{tpu_custom_call.1} parent=1 // pred_check
      _
    $region43: #{tpu_custom_call.1} parent=1 // pred_check_branch
      %254 = sbr.rel (0) target = $region45
    $region44: #{tpu_custom_call.1} parent=1 // pred_region
      _
    $region45: #{tpu_custom_call.1} parent=1 // pred_fallthru
      _
    // Predicated region
    $region46: #{tpu_custom_call.1} parent=1 // pred_check
      _
    $region47: #{tpu_custom_call.1} parent=1 // pred_check_branch
      %256 = sbr.rel (0) target = $region49
    $region48: #{tpu_custom_call.1} parent=1 // pred_region
      _
    $region49: #{tpu_custom_call.1} parent=1 // pred_fallthru
      _
    %257 = vsyncpa [#allocation4], 1

</llo_original>
